<compile_context>
chip_gen: v5e
topology: v5e:2x2
jax: 0.10.0
libtpu: 0.0.40
codegen_flags: <defaults>
</compile_context>

<pallas_src>
import jax
import jax.numpy as jnp
from jax.experimental import pallas as pl
from jax.experimental.pallas import tpu as pltpu


def mlp_kernel(x_ref, w1_ref, b1_ref, w2_ref, b2_ref, o_ref):
    # hidden = relu(x @ W1 + b1): bf16 operands, f32 MXU accumulate, f32 epilogue.
    h = jnp.dot(x_ref[...], w1_ref[...], preferred_element_type=jnp.float32)
    h = jnp.maximum(h + b1_ref[...], 0.0)          # (B, H) + (1, H) broadcast, f32
    # out = relu(h @ W2 + b2): second matmul is tiny (K=32), keep it f32.
    y = jnp.dot(h, w2_ref[...], preferred_element_type=jnp.float32)
    o_ref[...] = jnp.maximum(y + b2_ref[...], 0.0).astype(o_ref.dtype)


def fashion_mnist_model_v01(x_nchw, w1, b1, w2, b2):
    """x_nchw: [B, C, H, W] float32; w1: [in, hidden]; w2: [hidden, out].

    Returns [B, out] float32 = relu(relu(flatten(x) @ W1 + b1) @ W2 + b2).
    """
    B = x_nchw.shape[0]
    in_features, hidden = w1.shape
    out_features = w2.shape[1]

    # nn.Flatten(): contiguous reshape, effectively free as XLA glue.
    x2d = x_nchw.reshape(B, in_features)

    # bf16 for the dominant first-matmul operands (halves x/W1 DMA + vregs).
    x_bf16 = x2d.astype(jnp.bfloat16)
    w1_bf16 = w1.astype(jnp.bfloat16)
    b1_2d = b1.reshape(1, hidden).astype(jnp.float32)

    # Lane-dense output: pad the output dim up to a multiple of 128 (zeros in
    # the extra columns), then slice back in the wrapper.
    padded_out = max(128, ((out_features + 127) // 128) * 128)
    w2_p = jnp.zeros((hidden, padded_out), jnp.float32).at[:, :out_features].set(
        w2.astype(jnp.float32))
    b2_p = jnp.zeros((1, padded_out), jnp.float32).at[:, :out_features].set(
        b2.astype(jnp.float32))

    vmem = pl.BlockSpec(memory_space=pltpu.MemorySpace.VMEM)

    out_padded = pl.pallas_call(
        mlp_kernel,
        out_shape=jax.ShapeDtypeStruct((B, padded_out), jnp.float32),
        in_specs=[vmem, vmem, vmem, vmem, vmem],
        out_specs=vmem,
    )(x_bf16, w1_bf16, b1_2d, w2_p, b2_p)

    return out_padded[:, :out_features]


def reference_forward(x_nchw, w1, b1, w2, b2):
    x = x_nchw.reshape(x_nchw.shape[0], -1)
    h = jnp.maximum(x @ w1 + b1, 0.0)
    return jnp.maximum(h @ w2 + b2, 0.0)


if __name__ == "__main__":
    # FashionMNIST geometry: 1x28x28 inputs -> 784 features, 10 classes.
    # B = 128 fills the MXU M dimension (per perf review); total resident
    # data is well under 1 MiB, so everything lives comfortably in VMEM.
    B, C, H, W = 128, 1, 28, 28
    input_shape = C * H * W        # 784
    neurons = 32
    output_shape = 10

    key = jax.random.PRNGKey(0)
    kx, kw1, kb1, kw2, kb2 = jax.random.split(key, 5)

    x = jax.random.normal(kx, (B, C, H, W), dtype=jnp.float32)

    # torch.nn.Linear-style uniform(-1/sqrt(fan_in), 1/sqrt(fan_in)) init.
    lim1 = 1.0 / jnp.sqrt(jnp.float32(input_shape))
    w1 = jax.random.uniform(kw1, (input_shape, neurons), jnp.float32, -lim1, lim1)
    b1 = jax.random.uniform(kb1, (neurons,), jnp.float32, -lim1, lim1)
    lim2 = 1.0 / jnp.sqrt(jnp.float32(neurons))
    w2 = jax.random.uniform(kw2, (neurons, output_shape), jnp.float32, -lim2, lim2)
    b2 = jax.random.uniform(kb2, (output_shape,), jnp.float32, -lim2, lim2)

    out = fashion_mnist_model_v01(x, w1, b1, w2, b2)
    out = jax.block_until_ready(out)

    ref = reference_forward(x, w1, b1, w2, b2)
    assert out.shape == (B, output_shape), out.shape
    # bf16 first-layer operands => ~1e-3-level deltas vs. the pure-f32 reference.
    assert jnp.allclose(out, ref, atol=2e-2, rtol=2e-2), "mismatch vs reference"

    print("KERNEL_OK")
</pallas_src>

<mosaic_0001>
module attributes {stable_mosaic.version = 11 : i64} {
  func.func @mlp_kernel(%arg0: memref<128x784xbf16, #tpu.memory_space<vmem>>, %arg1: memref<784x32xbf16, #tpu.memory_space<vmem>>, %arg2: memref<1x32xf32, #tpu.memory_space<vmem>>, %arg3: memref<32x128xf32, #tpu.memory_space<vmem>>, %arg4: memref<1x128xf32, #tpu.memory_space<vmem>>, %arg5: memref<128x128xf32, #tpu.memory_space<vmem>>) attributes {dimension_semantics = [], scalar_prefetch = 0 : i64, scratch_operands = 0 : i64, tpu.core_type = #tpu.core_type<tc>} {
    %c0 = arith.constant 0 : index
    %c0_0 = arith.constant 0 : index
    %0 = vector.load %arg0[%c0, %c0_0] : memref<128x784xbf16, #tpu.memory_space<vmem>>, vector<128x784xbf16>
    %c0_1 = arith.constant 0 : index
    %c0_2 = arith.constant 0 : index
    %1 = vector.load %arg1[%c0_1, %c0_2] : memref<784x32xbf16, #tpu.memory_space<vmem>>, vector<784x32xbf16>
    %cst = arith.constant dense<0.000000e+00> : vector<128x32xf32>
    %2 = tpu.matmul %0, %1, %cst {dimension_numbers = #tpu.dot_dimension_numbers<[1], [0], [0], [1], [0, 0, 1, 1], [], []>} : vector<128x784xbf16>, vector<784x32xbf16>, vector<128x32xf32> -> vector<128x32xf32>
    %c0_3 = arith.constant 0 : index
    %c0_4 = arith.constant 0 : index
    %3 = vector.load %arg2[%c0_3, %c0_4] : memref<1x32xf32, #tpu.memory_space<vmem>>, vector<1x32xf32>
    %4 = vector.broadcast %3 : vector<1x32xf32> to vector<128x32xf32>
    %5 = arith.addf %2, %4 : vector<128x32xf32>
    %cst_5 = arith.constant 0.000000e+00 : f32
    %6 = vector.broadcast %cst_5 : f32 to vector<128x32xf32>
    %7 = arith.maximumf %5, %6 : vector<128x32xf32>
    %c0_6 = arith.constant 0 : index
    %c0_7 = arith.constant 0 : index
    %8 = vector.load %arg3[%c0_6, %c0_7] : memref<32x128xf32, #tpu.memory_space<vmem>>, vector<32x128xf32>
    %cst_8 = arith.constant dense<0.000000e+00> : vector<128x128xf32>
    %9 = tpu.matmul %7, %8, %cst_8 {dimension_numbers = #tpu.dot_dimension_numbers<[1], [0], [0], [1], [0, 0, 1, 1], [], []>} : vector<128x32xf32>, vector<32x128xf32>, vector<128x128xf32> -> vector<128x128xf32>
    %c0_9 = arith.constant 0 : index
    %c0_10 = arith.constant 0 : index
    %10 = vector.load %arg4[%c0_9, %c0_10] : memref<1x128xf32, #tpu.memory_space<vmem>>, vector<1x128xf32>
    %11 = vector.broadcast %10 : vector<1x128xf32> to vector<128x128xf32>
    %12 = arith.addf %9, %11 : vector<128x128xf32>
    %cst_11 = arith.constant 0.000000e+00 : f32
    %13 = vector.broadcast %cst_11 : f32 to vector<128x128xf32>
    %14 = arith.maximumf %12, %13 : vector<128x128xf32>
    %c0_12 = arith.constant 0 : index
    %c0_13 = arith.constant 0 : index
    %15 = vector.load %arg5[%c0_12, %c0_13] : memref<128x128xf32, #tpu.memory_space<vmem>>, vector<128x128xf32>
    tpu.vector_store %arg5[%c0_12, %c0_13], %14 {strides = array<i32>} : memref<128x128xf32, #tpu.memory_space<vmem>>, vector<128x128xf32>,
    return
  }
}

</mosaic_0001>

<llo_original>
// kernel: tpu_custom_call.1
$region0: #{tpu_custom_call.1}
  #allocation0 [shape = 'u32[]', space=smem, size = 0x4, offset = 0x4, fixed_abs, tag = 'smem constant byte address 0x4 - core index']
  #allocation1 [shape = 'u32[72,128]{1,0:T(1,128)}', space=vmem, size = 0x9000, scoped, tag = 'internal scratch']
  %s0 = inlined_call_operand.vmem [shape: bf16[128,784], index: 0, kind: input, shape index: {}]
  %s1 = inlined_call_operand.vmem [shape: bf16[784,32], index: 1, kind: input, shape index: {}]
  %s2 = inlined_call_operand.vmem [shape: f32[1,32], index: 2, kind: input, shape index: {}]
  %s3 = inlined_call_operand.vmem [shape: f32[32,128], index: 3, kind: input, shape index: {}]
  %s4 = inlined_call_operand.vmem [shape: f32[1,128], index: 4, kind: input, shape index: {}]
  %s5 = inlined_call_operand.hbm [shape: f32[128,128], index: 5, kind: output, shape index: {}]
  %s6 = sld [smem:[#allocation0]]
  $region30: #{tpu_custom_call.1} parent=0
    _
  %s8 = ssub.s32 1, %s6
  %s9 = scalar_select 0, %s8, %s6
  $region1: #{tpu_custom_call.1} parent=0
    #allocation2 [shape = 'u8[65536]{0}', space=vmem, size = 0x10000, scoped, tag = 'output window, operand 0, single buffered']
    #allocation3 [shape = 's32[1]{0}', space=sflag, size = 0x4, scoped, tag = 'scoped memory for tpu_custom_call.1']
    %10 = vsyncpa [#allocation3], 0
    // Predicated region
    $region2: #{tpu_custom_call.1} parent=1 // pred_check
      _
    $region3: #{tpu_custom_call.1} parent=1 // pred_check_branch
      %12 = sbr.rel (0) target = $region5
    $region4: #{tpu_custom_call.1} parent=1 // pred_region
      _
    $region5: #{tpu_custom_call.1} parent=1 // pred_fallthru
      _
    // Predicated region
    $region6: #{tpu_custom_call.1} parent=1 // pred_check
      _
    $region7: #{tpu_custom_call.1} parent=1 // pred_check_branch
      %14 = sbr.rel (0) target = $region9
    $region8: #{tpu_custom_call.1} parent=1 // pred_region
      _
    $region9: #{tpu_custom_call.1} parent=1 // pred_fallthru
      _
    // Predicated region
    $region10: #{tpu_custom_call.1} parent=1 // pred_check
      _
    $region11: #{tpu_custom_call.1} parent=1 // pred_check_branch
      %16 = sbr.rel (0) target = $region13
    $region12: #{tpu_custom_call.1} parent=1 // pred_region
      _
    $region13: #{tpu_custom_call.1} parent=1 // pred_fallthru
      _
    // Predicated region
    $region14: #{tpu_custom_call.1} parent=1 // pred_check
      _
    $region15: #{tpu_custom_call.1} parent=1 // pred_check_branch
      %18 = sbr.rel (0) target = $region17
    $region16: #{tpu_custom_call.1} parent=1 // pred_region
      _
    $region17: #{tpu_custom_call.1} parent=1 // pred_fallthru
      _
    // Predicated region
    $region18: #{tpu_custom_call.1} parent=1 // pred_check
      _
    $region19: #{tpu_custom_call.1} parent=1 // pred_check_branch
      %20 = sbr.rel (0) target = $region21
    $region20: #{tpu_custom_call.1} parent=1 // pred_region
      _
    $region21: #{tpu_custom_call.1} parent=1 // pred_fallthru
      _
    %v22 = vld [vmem:[%s0] sm:$0xff]
    %v23 = vld [vmem:[%s0 + $0x8] sm:$0xff]
    %v24 = vld [vmem:[%s0 + $0x10] sm:$0xff]
    %v25 = vld [vmem:[%s0 + $0x18] sm:$0xf]
    %v26 = vld [vmem:[%s0 + $0x1c] sm:$0xff]
    %v27 = vld [vmem:[%s0 + $0x24] sm:$0xff]
    %v28 = vld [vmem:[%s0 + $0x2c] sm:$0xff]
    %v29 = vld [vmem:[%s0 + $0x34] sm:$0xf]
    %v30 = vld [vmem:[%s0 + $0x38] sm:$0xff]
    %v31 = vld [vmem:[%s0 + $0x40] sm:$0xff]
    %v32 = vld [vmem:[%s0 + $0x48] sm:$0xff]
    %v33 = vld [vmem:[%s0 + $0x50] sm:$0xf]
    %v34 = vld [vmem:[%s0 + $0x54] sm:$0xff]
    %v35 = vld [vmem:[%s0 + $0x5c] sm:$0xff]
    %v36 = vld [vmem:[%s0 + $0x64] sm:$0xff]
    %v37 = vld [vmem:[%s0 + $0x6c] sm:$0xf]
    %v38 = vld [vmem:[%s0 + $0x70] sm:$0xff]
    %v39 = vld [vmem:[%s0 + $0x78] sm:$0xff]
    %v40 = vld [vmem:[%s0 + $0x80] sm:$0xff]
    %v41 = vld [vmem:[%s0 + $0x88] sm:$0xf]
    %v42 = vld [vmem:[%s0 + $0x8c] sm:$0xff]
    %v43 = vld [vmem:[%s0 + $0x94] sm:$0xff]
    %v44 = vld [vmem:[%s0 + $0x9c] sm:$0xff]
    %v45 = vld [vmem:[%s0 + $0xa4] sm:$0xf]
    %v46 = vld [vmem:[%s0 + $0xa8] sm:$0xff]
    %v47 = vld [vmem:[%s0 + $0xb0] sm:$0xff]
    %v48 = vld [vmem:[%s0 + $0xb8] sm:$0xff]
    %v49 = vld [vmem:[%s0 + $0xc0] sm:$0xf]
    %v50 = vld [vmem:[%s0 + $0xc4] sm:$0xff]
    %v51 = vld [vmem:[%s0 + $0xcc] sm:$0xff]
    %v52 = vld [vmem:[%s0 + $0xd4] sm:$0xff]
    %v53 = vld [vmem:[%s0 + $0xdc] sm:$0xf]
    %v54 = vld [vmem:[%s0 + $0xe0] sm:$0xff]
    %v55 = vld [vmem:[%s0 + $0xe8] sm:$0xff]
    %v56 = vld [vmem:[%s0 + $0xf0] sm:$0xff]
    %v57 = vld [vmem:[%s0 + $0xf8] sm:$0xf]
    %v58 = vld [vmem:[%s0 + $0xfc] sm:$0xff]
    %v59 = vld [vmem:[%s0 + $0x104] sm:$0xff]
    %v60 = vld [vmem:[%s0 + $0x10c] sm:$0xff]
    %v61 = vld [vmem:[%s0 + $0x114] sm:$0xf]
    %v62 = vld [vmem:[%s0 + $0x118] sm:$0xff]
    %v63 = vld [vmem:[%s0 + $0x120] sm:$0xff]
    %v64 = vld [vmem:[%s0 + $0x128] sm:$0xff]
    %v65 = vld [vmem:[%s0 + $0x130] sm:$0xf]
    %v66 = vld [vmem:[%s0 + $0x134] sm:$0xff]
    %v67 = vld [vmem:[%s0 + $0x13c] sm:$0xff]
    %v68 = vld [vmem:[%s0 + $0x144] sm:$0xff]
    %v69 = vld [vmem:[%s0 + $0x14c] sm:$0xf]
    %v70 = vld [vmem:[%s0 + $0x150] sm:$0xff]
    %v71 = vld [vmem:[%s0 + $0x158] sm:$0xff]
    %v72 = vld [vmem:[%s0 + $0x160] sm:$0xff]
    %v73 = vld [vmem:[%s0 + $0x168] sm:$0xf]
    %v74 = vld [vmem:[%s0 + $0x16c] sm:$0xff]
    %v75 = vld [vmem:[%s0 + $0x174] sm:$0xff]
    %v76 = vld [vmem:[%s0 + $0x17c] sm:$0xff]
    %v77 = vld [vmem:[%s0 + $0x184] sm:$0xf]
    %v78 = vld [vmem:[%s0 + $0x188] sm:$0xff]
    %v79 = vld [vmem:[%s0 + $0x190] sm:$0xff]
    %v80 = vld [vmem:[%s0 + $0x198] sm:$0xff]
    %v81 = vld [vmem:[%s0 + $0x1a0] sm:$0xf]
    %v82 = vld [vmem:[%s0 + $0x1a4] sm:$0xff]
    %v83 = vld [vmem:[%s0 + $0x1ac] sm:$0xff]
    %v84 = vld [vmem:[%s0 + $0x1b4] sm:$0xff]
    %v85 = vld [vmem:[%s0 + $0x1bc] sm:$0xf]
    %v86 = vld [vmem:[%s1] sm:$0xf]
    %v87 = vld [vmem:[%s1 + $0x4] sm:$0xf]
    %v88 = vld [vmem:[%s1 + $0x8] sm:$0xf]
    %v89 = vld [vmem:[%s1 + $0xc] sm:$0xf]
    %v90 = vld [vmem:[%s1 + $0x10] sm:$0xf]
    %v91 = vld [vmem:[%s1 + $0x14] sm:$0xf]
    %v92 = vld [vmem:[%s1 + $0x18] sm:$0xf]
    %v93 = vld [vmem:[%s1 + $0x1c] sm:$0xf]
    %v94 = vld [vmem:[%s1 + $0x20] sm:$0xf]
    %v95 = vld [vmem:[%s1 + $0x24] sm:$0xf]
    %v96 = vld [vmem:[%s1 + $0x28] sm:$0xf]
    %v97 = vld [vmem:[%s1 + $0x2c] sm:$0xf]
    %v98 = vld [vmem:[%s1 + $0x30] sm:$0xf]
    %v99 = vld [vmem:[%s1 + $0x34] sm:$0xf]
    %v100 = vld [vmem:[%s1 + $0x38] sm:$0xf]
    %v101 = vld [vmem:[%s1 + $0x3c] sm:$0xf]
    %v102 = vld [vmem:[%s1 + $0x40] sm:$0xf]
    %v103 = vld [vmem:[%s1 + $0x44] sm:$0xf]
    %v104 = vld [vmem:[%s1 + $0x48] sm:$0xf]
    %v105 = vld [vmem:[%s1 + $0x4c] sm:$0xf]
    %v106 = vld [vmem:[%s1 + $0x50] sm:$0xf]
    %v107 = vld [vmem:[%s1 + $0x54] sm:$0xf]
    %v108 = vld [vmem:[%s1 + $0x58] sm:$0xf]
    %v109 = vld [vmem:[%s1 + $0x5c] sm:$0xf]
    %v110 = vld [vmem:[%s1 + $0x60] sm:$0xf]
    %v111 = vld [vmem:[%s1 + $0x64] sm:$0xf]
    %v112 = vld [vmem:[%s1 + $0x68] sm:$0xf]
    %v113 = vld [vmem:[%s1 + $0x6c] sm:$0xf]
    %v114 = vld [vmem:[%s1 + $0x70] sm:$0xf]
    %v115 = vld [vmem:[%s1 + $0x74] sm:$0xf]
    %v116 = vld [vmem:[%s1 + $0x78] sm:$0xf]
    %v117 = vld [vmem:[%s1 + $0x7c] sm:$0xf]
    %v118 = vld [vmem:[%s1 + $0x80] sm:$0xf]
    %v119 = vld [vmem:[%s1 + $0x84] sm:$0xf]
    %v120 = vld [vmem:[%s1 + $0x88] sm:$0xf]
    %v121 = vld [vmem:[%s1 + $0x8c] sm:$0xf]
    %v122 = vld [vmem:[%s1 + $0x90] sm:$0xf]
    %v123 = vld [vmem:[%s1 + $0x94] sm:$0xf]
    %v124 = vld [vmem:[%s1 + $0x98] sm:$0xf]
    %v125 = vld [vmem:[%s1 + $0x9c] sm:$0xf]
    %v126 = vld [vmem:[%s1 + $0xa0] sm:$0xf]
    %v127 = vld [vmem:[%s1 + $0xa4] sm:$0xf]
    %v128 = vld [vmem:[%s1 + $0xa8] sm:$0xf]
    %v129 = vld [vmem:[%s1 + $0xac] sm:$0xf]
    %v130 = vld [vmem:[%s1 + $0xb0] sm:$0xf]
    %v131 = vld [vmem:[%s1 + $0xb4] sm:$0xf]
    %v132 = vld [vmem:[%s1 + $0xb8] sm:$0xf]
    %v133 = vld [vmem:[%s1 + $0xbc] sm:$0xf]
    %v134 = vld [vmem:[%s1 + $0xc0] sm:$0xf]
    %v135 = vld [vmem:[%s1 + $0xc4] sm:$0xf]
    %v136 = vld [vmem:[%s1 + $0xc8] sm:$0xf]
    %v137 = vld [vmem:[%s1 + $0xcc] sm:$0xf]
    %v138 = vld [vmem:[%s1 + $0xd0] sm:$0xf]
    %v139 = vld [vmem:[%s1 + $0xd4] sm:$0xf]
    %v140 = vld [vmem:[%s1 + $0xd8] sm:$0xf]
    %v141 = vld [vmem:[%s1 + $0xdc] sm:$0xf]
    %v142 = vld [vmem:[%s1 + $0xe0] sm:$0xf]
    %v143 = vld [vmem:[%s1 + $0xe4] sm:$0xf]
    %v144 = vld [vmem:[%s1 + $0xe8] sm:$0xf]
    %v145 = vld [vmem:[%s1 + $0xec] sm:$0xf]
    %v146 = vld [vmem:[%s1 + $0xf0] sm:$0xf]
    %v147 = vld [vmem:[%s1 + $0xf4] sm:$0xf]
    %v148 = vld [vmem:[%s1 + $0xf8] sm:$0xf]
    %v149 = vld [vmem:[%s1 + $0xfc] sm:$0xf]
    %v150 = vld [vmem:[%s1 + $0x100] sm:$0xf]
    %v151 = vld [vmem:[%s1 + $0x104] sm:$0xf]
    %v152 = vld [vmem:[%s1 + $0x108] sm:$0xf]
    %v153 = vld [vmem:[%s1 + $0x10c] sm:$0xf]
    %v154 = vld [vmem:[%s1 + $0x110] sm:$0xf]
    %v155 = vld [vmem:[%s1 + $0x114] sm:$0xf]
    %v156 = vld [vmem:[%s1 + $0x118] sm:$0xf]
    %v157 = vld [vmem:[%s1 + $0x11c] sm:$0xf]
    %v158 = vld [vmem:[%s1 + $0x120] sm:$0xf]
    %v159 = vld [vmem:[%s1 + $0x124] sm:$0xf]
    %v160 = vld [vmem:[%s1 + $0x128] sm:$0xf]
    %v161 = vld [vmem:[%s1 + $0x12c] sm:$0xf]
    %v162 = vld [vmem:[%s1 + $0x130] sm:$0xf]
    %v163 = vld [vmem:[%s1 + $0x134] sm:$0xf]
    %v164 = vld [vmem:[%s1 + $0x138] sm:$0xf]
    %v165 = vld [vmem:[%s1 + $0x13c] sm:$0xf]
    %v166 = vld [vmem:[%s1 + $0x140] sm:$0xf]
    %v167 = vld [vmem:[%s1 + $0x144] sm:$0xf]
    %v168 = vld [vmem:[%s1 + $0x148] sm:$0xf]
    %v169 = vld [vmem:[%s1 + $0x14c] sm:$0xf]
    %v170 = vld [vmem:[%s1 + $0x150] sm:$0xf]
    %v171 = vld [vmem:[%s1 + $0x154] sm:$0xf]
    %v172 = vld [vmem:[%s1 + $0x158] sm:$0xf]
    %v173 = vld [vmem:[%s1 + $0x15c] sm:$0xf]
    %v174 = vld [vmem:[%s1 + $0x160] sm:$0xf]
    %v175 = vld [vmem:[%s1 + $0x164] sm:$0xf]
    %v176 = vld [vmem:[%s1 + $0x168] sm:$0xf]
    %v177 = vld [vmem:[%s1 + $0x16c] sm:$0xf]
    %v178 = vld [vmem:[%s1 + $0x170] sm:$0xf]
    %v179 = vld [vmem:[%s1 + $0x174] sm:$0xf]
    %v180 = vld [vmem:[%s1 + $0x178] sm:$0xf]
    %v181 = vld [vmem:[%s1 + $0x17c] sm:$0xf]
    %v182 = vld [vmem:[%s1 + $0x180] sm:$0xf]
    %v183 = vld [vmem:[%s1 + $0x184] sm:$0xf]
    %v184 = vld [vmem:[%s2] sm:$0x1]
    %v186 = vperm.slane %v184, 0
    %v252 = vunpack.c.l.b16 %v22
    %v253 = vunpack.c.h.b16 %v22
    %v254 = vunpack.c.l.b16 %v23
    %v255 = vunpack.c.h.b16 %v23
    %v256 = vunpack.c.l.b16 %v24
    %v257 = vunpack.c.h.b16 %v24
    %v258 = vunpack.c.l.b16 %v25
    %v259 = vunpack.c.l.b16 %v26
    %v260 = vunpack.c.h.b16 %v26
    %v261 = vunpack.c.l.b16 %v27
    %v262 = vunpack.c.h.b16 %v27
    %v263 = vunpack.c.l.b16 %v28
    %v264 = vunpack.c.h.b16 %v28
    %v265 = vunpack.c.l.b16 %v29
    %v266 = vunpack.c.l.b16 %v30
    %v267 = vunpack.c.h.b16 %v30
    %v268 = vunpack.c.l.b16 %v31
    %v269 = vunpack.c.h.b16 %v31
    %v270 = vunpack.c.l.b16 %v32
    %v271 = vunpack.c.h.b16 %v32
    %v272 = vunpack.c.l.b16 %v33
    %v273 = vunpack.c.l.b16 %v34
    %v274 = vunpack.c.h.b16 %v34
    %v275 = vunpack.c.l.b16 %v35
    %v276 = vunpack.c.h.b16 %v35
    %v277 = vunpack.c.l.b16 %v36
    %v278 = vunpack.c.h.b16 %v36
    %v279 = vunpack.c.l.b16 %v37
    %v280 = vunpack.c.l.b16 %v38
    %v281 = vunpack.c.h.b16 %v38
    %v282 = vunpack.c.l.b16 %v39
    %v283 = vunpack.c.h.b16 %v39
    %v284 = vunpack.c.l.b16 %v40
    %v285 = vunpack.c.h.b16 %v40
    %v286 = vunpack.c.l.b16 %v41
    %v287 = vunpack.c.l.b16 %v42
    %v288 = vunpack.c.h.b16 %v42
    %v289 = vunpack.c.l.b16 %v43
    %v290 = vunpack.c.h.b16 %v43
    %v291 = vunpack.c.l.b16 %v44
    %v292 = vunpack.c.h.b16 %v44
    %v293 = vunpack.c.l.b16 %v45
    %v294 = vunpack.c.l.b16 %v46
    %v295 = vunpack.c.h.b16 %v46
    %v296 = vunpack.c.l.b16 %v47
    %v297 = vunpack.c.h.b16 %v47
    %v298 = vunpack.c.l.b16 %v48
    %v299 = vunpack.c.h.b16 %v48
    %v300 = vunpack.c.l.b16 %v49
    %v301 = vunpack.c.l.b16 %v50
    %v302 = vunpack.c.h.b16 %v50
    %v303 = vunpack.c.l.b16 %v51
    %v304 = vunpack.c.h.b16 %v51
    %v305 = vunpack.c.l.b16 %v52
    %v306 = vunpack.c.h.b16 %v52
    %v307 = vunpack.c.l.b16 %v53
    %v308 = vunpack.c.l.b16 %v54
    %v309 = vunpack.c.h.b16 %v54
    %v310 = vunpack.c.l.b16 %v55
    %v311 = vunpack.c.h.b16 %v55
    %v312 = vunpack.c.l.b16 %v56
    %v313 = vunpack.c.h.b16 %v56
    %v314 = vunpack.c.l.b16 %v57
    %v315 = vunpack.c.l.b16 %v58
    %v316 = vunpack.c.h.b16 %v58
    %v317 = vunpack.c.l.b16 %v59
    %v318 = vunpack.c.h.b16 %v59
    %v319 = vunpack.c.l.b16 %v60
    %v320 = vunpack.c.h.b16 %v60
    %v321 = vunpack.c.l.b16 %v61
    %v322 = vunpack.c.l.b16 %v62
    %v323 = vunpack.c.h.b16 %v62
    %v324 = vunpack.c.l.b16 %v63
    %v325 = vunpack.c.h.b16 %v63
    %v326 = vunpack.c.l.b16 %v64
    %v327 = vunpack.c.h.b16 %v64
    %v328 = vunpack.c.l.b16 %v65
    %v329 = vunpack.c.l.b16 %v66
    %v330 = vunpack.c.h.b16 %v66
    %v331 = vunpack.c.l.b16 %v67
    %v332 = vunpack.c.h.b16 %v67
    %v333 = vunpack.c.l.b16 %v68
    %v334 = vunpack.c.h.b16 %v68
    %v335 = vunpack.c.l.b16 %v69
    %v336 = vunpack.c.l.b16 %v70
    %v337 = vunpack.c.h.b16 %v70
    %v338 = vunpack.c.l.b16 %v71
    %v339 = vunpack.c.h.b16 %v71
    %v340 = vunpack.c.l.b16 %v72
    %v341 = vunpack.c.h.b16 %v72
    %v342 = vunpack.c.l.b16 %v73
    %v343 = vunpack.c.l.b16 %v74
    %v344 = vunpack.c.h.b16 %v74
    %v345 = vunpack.c.l.b16 %v75
    %v346 = vunpack.c.h.b16 %v75
    %v347 = vunpack.c.l.b16 %v76
    %v348 = vunpack.c.h.b16 %v76
    %v349 = vunpack.c.l.b16 %v77
    %v350 = vunpack.c.l.b16 %v78
    %v351 = vunpack.c.h.b16 %v78
    %v352 = vunpack.c.l.b16 %v79
    %v353 = vunpack.c.h.b16 %v79
    %v354 = vunpack.c.l.b16 %v80
    %v355 = vunpack.c.h.b16 %v80
    %v356 = vunpack.c.l.b16 %v81
    %v357 = vunpack.c.l.b16 %v82
    %v358 = vunpack.c.h.b16 %v82
    %v359 = vunpack.c.l.b16 %v83
    %v360 = vunpack.c.h.b16 %v83
    %v361 = vunpack.c.l.b16 %v84
    %v362 = vunpack.c.h.b16 %v84
    %v363 = vunpack.c.l.b16 %v85
    %v364 = vpack.c.b16 %v259, %v252
    %v365 = vpack.c.b16 %v260, %v253
    %v366 = vpack.c.b16 %v261, %v254
    %v367 = vpack.c.b16 %v262, %v255
    %v368 = vpack.c.b16 %v263, %v256
    %v369 = vpack.c.b16 %v264, %v257
    %v370 = vpack.c.b16 %v265, %v258
    %v371 = vpack.c.b16 %v273, %v266
    %v372 = vpack.c.b16 %v274, %v267
    %v373 = vpack.c.b16 %v275, %v268
    %v374 = vpack.c.b16 %v276, %v269
    %v375 = vpack.c.b16 %v277, %v270
    %v376 = vpack.c.b16 %v278, %v271
    %v377 = vpack.c.b16 %v279, %v272
    %v378 = vpack.c.b16 %v287, %v280
    %v379 = vpack.c.b16 %v288, %v281
    %v380 = vpack.c.b16 %v289, %v282
    %v381 = vpack.c.b16 %v290, %v283
    %v382 = vpack.c.b16 %v291, %v284
    %v383 = vpack.c.b16 %v292, %v285
    %v384 = vpack.c.b16 %v293, %v286
    %v385 = vpack.c.b16 %v301, %v294
    %v386 = vpack.c.b16 %v302, %v295
    %v387 = vpack.c.b16 %v303, %v296
    %v388 = vpack.c.b16 %v304, %v297
    %v389 = vpack.c.b16 %v305, %v298
    %v390 = vpack.c.b16 %v306, %v299
    %v391 = vpack.c.b16 %v307, %v300
    %v392 = vpack.c.b16 %v315, %v308
    %v393 = vpack.c.b16 %v316, %v309
    %v394 = vpack.c.b16 %v317, %v310
    %v395 = vpack.c.b16 %v318, %v311
    %v396 = vpack.c.b16 %v319, %v312
    %v397 = vpack.c.b16 %v320, %v313
    %v398 = vpack.c.b16 %v321, %v314
    %v399 = vpack.c.b16 %v329, %v322
    %v400 = vpack.c.b16 %v330, %v323
    %v401 = vpack.c.b16 %v331, %v324
    %v402 = vpack.c.b16 %v332, %v325
    %v403 = vpack.c.b16 %v333, %v326
    %v404 = vpack.c.b16 %v334, %v327
    %v405 = vpack.c.b16 %v335, %v328
    %v406 = vpack.c.b16 %v343, %v336
    %v407 = vpack.c.b16 %v344, %v337
    %v408 = vpack.c.b16 %v345, %v338
    %v409 = vpack.c.b16 %v346, %v339
    %v410 = vpack.c.b16 %v347, %v340
    %v411 = vpack.c.b16 %v348, %v341
    %v412 = vpack.c.b16 %v349, %v342
    %v413 = vpack.c.b16 %v357, %v350
    %v414 = vpack.c.b16 %v358, %v351
    %v415 = vpack.c.b16 %v359, %v352
    %v416 = vpack.c.b16 %v360, %v353
    %v417 = vpack.c.b16 %v361, %v354
    %v418 = vpack.c.b16 %v362, %v355
    %v419 = vpack.c.b16 %v363, %v356
    %v566 = vunpack.c.l.b16 %v86
    %v567 = vunpack.c.l.b16 %v87
    %v568 = vunpack.c.l.b16 %v88
    %v569 = vunpack.c.l.b16 %v89
    %v570 = vunpack.c.l.b16 %v90
    %v571 = vunpack.c.l.b16 %v91
    %v572 = vunpack.c.l.b16 %v92
    %v573 = vunpack.c.l.b16 %v93
    %v574 = vunpack.c.l.b16 %v94
    %v575 = vunpack.c.l.b16 %v95
    %v576 = vunpack.c.l.b16 %v96
    %v577 = vunpack.c.l.b16 %v97
    %v578 = vunpack.c.l.b16 %v98
    %v579 = vunpack.c.l.b16 %v99
    %v580 = vunpack.c.l.b16 %v100
    %v581 = vunpack.c.l.b16 %v101
    %v582 = vunpack.c.l.b16 %v102
    %v583 = vunpack.c.l.b16 %v103
    %v584 = vunpack.c.l.b16 %v104
    %v585 = vunpack.c.l.b16 %v105
    %v586 = vunpack.c.l.b16 %v106
    %v587 = vunpack.c.l.b16 %v107
    %v588 = vunpack.c.l.b16 %v108
    %v589 = vunpack.c.l.b16 %v109
    %v590 = vunpack.c.l.b16 %v110
    %v591 = vunpack.c.l.b16 %v111
    %v592 = vunpack.c.l.b16 %v112
    %v593 = vunpack.c.l.b16 %v113
    %v594 = vunpack.c.l.b16 %v114
    %v595 = vunpack.c.l.b16 %v115
    %v596 = vunpack.c.l.b16 %v116
    %v597 = vunpack.c.l.b16 %v117
    %v598 = vunpack.c.l.b16 %v118
    %v599 = vunpack.c.l.b16 %v119
    %v600 = vunpack.c.l.b16 %v120
    %v601 = vunpack.c.l.b16 %v121
    %v602 = vunpack.c.l.b16 %v122
    %v603 = vunpack.c.l.b16 %v123
    %v604 = vunpack.c.l.b16 %v124
    %v605 = vunpack.c.l.b16 %v125
    %v606 = vunpack.c.l.b16 %v126
    %v607 = vunpack.c.l.b16 %v127
    %v608 = vunpack.c.l.b16 %v128
    %v609 = vunpack.c.l.b16 %v129
    %v610 = vunpack.c.l.b16 %v130
    %v611 = vunpack.c.l.b16 %v131
    %v612 = vunpack.c.l.b16 %v132
    %v613 = vunpack.c.l.b16 %v133
    %v614 = vunpack.c.l.b16 %v134
    %v615 = vunpack.c.l.b16 %v135
    %v616 = vunpack.c.l.b16 %v136
    %v617 = vunpack.c.l.b16 %v137
    %v618 = vunpack.c.l.b16 %v138
    %v619 = vunpack.c.l.b16 %v139
    %v620 = vunpack.c.l.b16 %v140
    %v621 = vunpack.c.l.b16 %v141
    %v622 = vunpack.c.l.b16 %v142
    %v623 = vunpack.c.l.b16 %v143
    %v624 = vunpack.c.l.b16 %v144
    %v625 = vunpack.c.l.b16 %v145
    %v626 = vunpack.c.l.b16 %v146
    %v627 = vunpack.c.l.b16 %v147
    %v628 = vunpack.c.l.b16 %v148
    %v629 = vunpack.c.l.b16 %v149
    %v630 = vunpack.c.l.b16 %v150
    %v631 = vunpack.c.l.b16 %v151
    %v632 = vunpack.c.l.b16 %v152
    %v633 = vunpack.c.l.b16 %v153
    %v634 = vunpack.c.l.b16 %v154
    %v635 = vunpack.c.l.b16 %v155
    %v636 = vunpack.c.l.b16 %v156
    %v637 = vunpack.c.l.b16 %v157
    %v638 = vunpack.c.l.b16 %v158
    %v639 = vunpack.c.l.b16 %v159
    %v640 = vunpack.c.l.b16 %v160
    %v641 = vunpack.c.l.b16 %v161
    %v642 = vunpack.c.l.b16 %v162
    %v643 = vunpack.c.l.b16 %v163
    %v644 = vunpack.c.l.b16 %v164
    %v645 = vunpack.c.l.b16 %v165
    %v646 = vunpack.c.l.b16 %v166
    %v647 = vunpack.c.l.b16 %v167
    %v648 = vunpack.c.l.b16 %v168
    %v649 = vunpack.c.l.b16 %v169
    %v650 = vunpack.c.l.b16 %v170
    %v651 = vunpack.c.l.b16 %v171
    %v652 = vunpack.c.l.b16 %v172
    %v653 = vunpack.c.l.b16 %v173
    %v654 = vunpack.c.l.b16 %v174
    %v655 = vunpack.c.l.b16 %v175
    %v656 = vunpack.c.l.b16 %v176
    %v657 = vunpack.c.l.b16 %v177
    %v658 = vunpack.c.l.b16 %v178
    %v659 = vunpack.c.l.b16 %v179
    %v660 = vunpack.c.l.b16 %v180
    %v661 = vunpack.c.l.b16 %v181
    %v662 = vunpack.c.l.b16 %v182
    %v663 = vunpack.c.l.b16 %v183
    %v664 = vpack.c.b16 %v567, %v566
    %v665 = vpack.c.b16 %v569, %v568
    %v666 = vpack.c.b16 %v571, %v570
    %v667 = vpack.c.b16 %v573, %v572
    %v668 = vpack.c.b16 %v575, %v574
    %v669 = vpack.c.b16 %v577, %v576
    %v670 = vpack.c.b16 %v579, %v578
    %v671 = vpack.c.b16 %v581, %v580
    %v672 = vpack.c.b16 %v583, %v582
    %v673 = vpack.c.b16 %v585, %v584
    %v674 = vpack.c.b16 %v587, %v586
    %v675 = vpack.c.b16 %v589, %v588
    %v676 = vpack.c.b16 %v591, %v590
    %v677 = vpack.c.b16 %v593, %v592
    %v678 = vpack.c.b16 %v595, %v594
    %v679 = vpack.c.b16 %v597, %v596
    %v680 = vpack.c.b16 %v599, %v598
    %v681 = vpack.c.b16 %v601, %v600
    %v682 = vpack.c.b16 %v603, %v602
    %v683 = vpack.c.b16 %v605, %v604
    %v684 = vpack.c.b16 %v607, %v606
    %v685 = vpack.c.b16 %v609, %v608
    %v686 = vpack.c.b16 %v611, %v610
    %v687 = vpack.c.b16 %v613, %v612
    %v688 = vpack.c.b16 %v615, %v614
    %v689 = vpack.c.b16 %v617, %v616
    %v690 = vpack.c.b16 %v619, %v618
    %v691 = vpack.c.b16 %v621, %v620
    %v692 = vpack.c.b16 %v623, %v622
    %v693 = vpack.c.b16 %v625, %v624
    %v694 = vpack.c.b16 %v627, %v626
    %v695 = vpack.c.b16 %v629, %v628
    %v696 = vpack.c.b16 %v631, %v630
    %v697 = vpack.c.b16 %v633, %v632
    %v698 = vpack.c.b16 %v635, %v634
    %v699 = vpack.c.b16 %v637, %v636
    %v700 = vpack.c.b16 %v639, %v638
    %v701 = vpack.c.b16 %v641, %v640
    %v702 = vpack.c.b16 %v643, %v642
    %v703 = vpack.c.b16 %v645, %v644
    %v704 = vpack.c.b16 %v647, %v646
    %v705 = vpack.c.b16 %v649, %v648
    %v706 = vpack.c.b16 %v651, %v650
    %v707 = vpack.c.b16 %v653, %v652
    %v708 = vpack.c.b16 %v655, %v654
    %v709 = vpack.c.b16 %v657, %v656
    %v710 = vpack.c.b16 %v659, %v658
    %v711 = vpack.c.b16 %v661, %v660
    %v712 = vpack.c.b16 %v663, %v662
    %vm762 = vcmask 130048
    %v764 = vsel %vm762, %v370, 0
    %v767 = vsel %vm762, %v377, 0
    %v770 = vsel %vm762, %v384, 0
    %v773 = vsel %vm762, %v391, 0
    %v776 = vsel %vm762, %v398, 0
    %v779 = vsel %vm762, %v405, 0
    %v782 = vsel %vm762, %v412, 0
    %v785 = vsel %vm762, %v419, 0
    %787 = vmatpush.bf16.msra.mxu0 %v671
    %788 = vmatpush.bf16.msra.mxu0 %v670
    %789 = vmatpush.bf16.msra.mxu0 %v669
    %790 = vmatpush.bf16.msra.mxu0 %v668
    %791 = vmatpush.bf16.msra.mxu0 %v667
    %792 = vmatpush.bf16.msra.mxu0 %v666
    %793 = vmatpush.bf16.msra.mxu0 %v665
    %794 = vmatpush.bf16.msra.mxu0 %v664
    %795 = vmatmul.bf16.gmra.mxu0 %v364
    %v796 = vpop.f32.mrf.mxu0
    %v797 = vadd.f32 %v186, %v796
    %v798 = vpop.f32.mrf.mxu0
    %v799 = vadd.f32 %v186, %v798
    %800 = vmatmul.bf16.gmra.mxu0 %v371
    %v801 = vpop.f32.mrf.mxu0
    %v802 = vadd.f32 %v186, %v801
    %v803 = vpop.f32.mrf.mxu0
    %v804 = vadd.f32 %v186, %v803
    %805 = vmatmul.bf16.gmra.mxu0 %v378
    %v806 = vpop.f32.mrf.mxu0
    %v807 = vadd.f32 %v186, %v806
    %v808 = vpop.f32.mrf.mxu0
    %v809 = vadd.f32 %v186, %v808
    %810 = vmatmul.bf16.gmra.mxu0 %v385
    %v811 = vpop.f32.mrf.mxu0
    %v812 = vadd.f32 %v186, %v811
    %v813 = vpop.f32.mrf.mxu0
    %v814 = vadd.f32 %v186, %v813
    %815 = vmatmul.bf16.gmra.mxu0 %v392
    %v816 = vpop.f32.mrf.mxu0
    %v817 = vadd.f32 %v186, %v816
    %v818 = vpop.f32.mrf.mxu0
    %v819 = vadd.f32 %v186, %v818
    %820 = vmatmul.bf16.gmra.mxu0 %v399
    %v821 = vpop.f32.mrf.mxu0
    %v822 = vadd.f32 %v186, %v821
    %v823 = vpop.f32.mrf.mxu0
    %v824 = vadd.f32 %v186, %v823
    %825 = vmatmul.bf16.gmra.mxu0 %v406
    %v826 = vpop.f32.mrf.mxu0
    %v827 = vadd.f32 %v186, %v826
    %v828 = vpop.f32.mrf.mxu0
    %v829 = vadd.f32 %v186, %v828
    %830 = vmatmul.bf16.gmra.mxu0 %v413
    %v831 = vpop.f32.mrf.mxu0
    %v832 = vadd.f32 %v186, %v831
    %v833 = vpop.f32.mrf.mxu0
    %v834 = vadd.f32 %v186, %v833
    %835 = vdwg.mxu0
    %836 = vmatpush.bf16.msra.mxu0 %v679
    %837 = vmatpush.bf16.msra.mxu0 %v678
    %838 = vmatpush.bf16.msra.mxu0 %v677
    %839 = vmatpush.bf16.msra.mxu0 %v676
    %840 = vmatpush.bf16.msra.mxu0 %v675
    %841 = vmatpush.bf16.msra.mxu0 %v674
    %842 = vmatpush.bf16.msra.mxu0 %v673
    %843 = vmatpush.bf16.msra.mxu0 %v672
    %844 = vmatmul.bf16.gmra.mxu0 %v365
    %v845 = vpop.f32.mrf.mxu0
    %v846 = vadd.f32 %v797, %v845
    %v847 = vpop.f32.mrf.mxu0
    %v848 = vadd.f32 %v799, %v847
    %849 = vmatmul.bf16.gmra.mxu0 %v372
    %v850 = vpop.f32.mrf.mxu0
    %v851 = vadd.f32 %v802, %v850
    %v852 = vpop.f32.mrf.mxu0
    %v853 = vadd.f32 %v804, %v852
    %854 = vmatmul.bf16.gmra.mxu0 %v379
    %v855 = vpop.f32.mrf.mxu0
    %v856 = vadd.f32 %v807, %v855
    %v857 = vpop.f32.mrf.mxu0
    %v858 = vadd.f32 %v809, %v857
    %859 = vmatmul.bf16.gmra.mxu0 %v386
    %v860 = vpop.f32.mrf.mxu0
    %v861 = vadd.f32 %v812, %v860
    %v862 = vpop.f32.mrf.mxu0
    %v863 = vadd.f32 %v814, %v862
    %864 = vmatmul.bf16.gmra.mxu0 %v393
    %v865 = vpop.f32.mrf.mxu0
    %v866 = vadd.f32 %v817, %v865
    %v867 = vpop.f32.mrf.mxu0
    %v868 = vadd.f32 %v819, %v867
    %869 = vmatmul.bf16.gmra.mxu0 %v400
    %v870 = vpop.f32.mrf.mxu0
    %v871 = vadd.f32 %v822, %v870
    %v872 = vpop.f32.mrf.mxu0
    %v873 = vadd.f32 %v824, %v872
    %874 = vmatmul.bf16.gmra.mxu0 %v407
    %v875 = vpop.f32.mrf.mxu0
    %v876 = vadd.f32 %v827, %v875
    %v877 = vpop.f32.mrf.mxu0
    %v878 = vadd.f32 %v829, %v877
    %879 = vmatmul.bf16.gmra.mxu0 %v414
    %v880 = vpop.f32.mrf.mxu0
    %v881 = vadd.f32 %v832, %v880
    %v882 = vpop.f32.mrf.mxu0
    %v883 = vadd.f32 %v834, %v882
    %884 = vdwg.mxu0
    %885 = vmatpush.bf16.msra.mxu0 %v687
    %886 = vmatpush.bf16.msra.mxu0 %v686
    %887 = vmatpush.bf16.msra.mxu0 %v685
    %888 = vmatpush.bf16.msra.mxu0 %v684
    %889 = vmatpush.bf16.msra.mxu0 %v683
    %890 = vmatpush.bf16.msra.mxu0 %v682
    %891 = vmatpush.bf16.msra.mxu0 %v681
    %892 = vmatpush.bf16.msra.mxu0 %v680
    %893 = vmatmul.bf16.gmra.mxu0 %v366
    %v894 = vpop.f32.mrf.mxu0
    %v895 = vadd.f32 %v846, %v894
    %v896 = vpop.f32.mrf.mxu0
    %v897 = vadd.f32 %v848, %v896
    %898 = vmatmul.bf16.gmra.mxu0 %v373
    %v899 = vpop.f32.mrf.mxu0
    %v900 = vadd.f32 %v851, %v899
    %v901 = vpop.f32.mrf.mxu0
    %v902 = vadd.f32 %v853, %v901
    %903 = vmatmul.bf16.gmra.mxu0 %v380
    %v904 = vpop.f32.mrf.mxu0
    %v905 = vadd.f32 %v856, %v904
    %v906 = vpop.f32.mrf.mxu0
    %v907 = vadd.f32 %v858, %v906
    %908 = vmatmul.bf16.gmra.mxu0 %v387
    %v909 = vpop.f32.mrf.mxu0
    %v910 = vadd.f32 %v861, %v909
    %v911 = vpop.f32.mrf.mxu0
    %v912 = vadd.f32 %v863, %v911
    %913 = vmatmul.bf16.gmra.mxu0 %v394
    %v914 = vpop.f32.mrf.mxu0
    %v915 = vadd.f32 %v866, %v914
    %v916 = vpop.f32.mrf.mxu0
    %v917 = vadd.f32 %v868, %v916
    %918 = vmatmul.bf16.gmra.mxu0 %v401
    %v919 = vpop.f32.mrf.mxu0
    %v920 = vadd.f32 %v871, %v919
    %v921 = vpop.f32.mrf.mxu0
    %v922 = vadd.f32 %v873, %v921
    %923 = vmatmul.bf16.gmra.mxu0 %v408
    %v924 = vpop.f32.mrf.mxu0
    %v925 = vadd.f32 %v876, %v924
    %v926 = vpop.f32.mrf.mxu0
    %v927 = vadd.f32 %v878, %v926
    %928 = vmatmul.bf16.gmra.mxu0 %v415
    %v929 = vpop.f32.mrf.mxu0
    %v930 = vadd.f32 %v881, %v929
    %v931 = vpop.f32.mrf.mxu0
    %v932 = vadd.f32 %v883, %v931
    %933 = vdwg.mxu0
    %934 = vmatpush.bf16.msra.mxu0 %v695
    %935 = vmatpush.bf16.msra.mxu0 %v694
    %936 = vmatpush.bf16.msra.mxu0 %v693
    %937 = vmatpush.bf16.msra.mxu0 %v692
    %938 = vmatpush.bf16.msra.mxu0 %v691
    %939 = vmatpush.bf16.msra.mxu0 %v690
    %940 = vmatpush.bf16.msra.mxu0 %v689
    %941 = vmatpush.bf16.msra.mxu0 %v688
    %942 = vmatmul.bf16.gmra.mxu0 %v367
    %v943 = vpop.f32.mrf.mxu0
    %v944 = vadd.f32 %v895, %v943
    %v945 = vpop.f32.mrf.mxu0
    %v946 = vadd.f32 %v897, %v945
    %947 = vmatmul.bf16.gmra.mxu0 %v374
    %v948 = vpop.f32.mrf.mxu0
    %v949 = vadd.f32 %v900, %v948
    %v950 = vpop.f32.mrf.mxu0
    %v951 = vadd.f32 %v902, %v950
    %952 = vmatmul.bf16.gmra.mxu0 %v381
    %v953 = vpop.f32.mrf.mxu0
    %v954 = vadd.f32 %v905, %v953
    %v955 = vpop.f32.mrf.mxu0
    %v956 = vadd.f32 %v907, %v955
    %957 = vmatmul.bf16.gmra.mxu0 %v388
    %v958 = vpop.f32.mrf.mxu0
    %v959 = vadd.f32 %v910, %v958
    %v960 = vpop.f32.mrf.mxu0
    %v961 = vadd.f32 %v912, %v960
    %962 = vmatmul.bf16.gmra.mxu0 %v395
    %v963 = vpop.f32.mrf.mxu0
    %v964 = vadd.f32 %v915, %v963
    %v965 = vpop.f32.mrf.mxu0
    %v966 = vadd.f32 %v917, %v965
    %967 = vmatmul.bf16.gmra.mxu0 %v402
    %v968 = vpop.f32.mrf.mxu0
    %v969 = vadd.f32 %v920, %v968
    %v970 = vpop.f32.mrf.mxu0
    %v971 = vadd.f32 %v922, %v970
    %972 = vmatmul.bf16.gmra.mxu0 %v409
    %v973 = vpop.f32.mrf.mxu0
    %v974 = vadd.f32 %v925, %v973
    %v975 = vpop.f32.mrf.mxu0
    %v976 = vadd.f32 %v927, %v975
    %977 = vmatmul.bf16.gmra.mxu0 %v416
    %v978 = vpop.f32.mrf.mxu0
    %v979 = vadd.f32 %v930, %v978
    %v980 = vpop.f32.mrf.mxu0
    %v981 = vadd.f32 %v932, %v980
    %982 = vdwg.mxu0
    %983 = vmatpush.bf16.msra.mxu0 %v703
    %984 = vmatpush.bf16.msra.mxu0 %v702
    %985 = vmatpush.bf16.msra.mxu0 %v701
    %986 = vmatpush.bf16.msra.mxu0 %v700
    %987 = vmatpush.bf16.msra.mxu0 %v699
    %988 = vmatpush.bf16.msra.mxu0 %v698
    %989 = vmatpush.bf16.msra.mxu0 %v697
    %990 = vmatpush.bf16.msra.mxu0 %v696
    %991 = vmatmul.bf16.gmra.mxu0 %v368
    %v992 = vpop.f32.mrf.mxu0
    %v993 = vadd.f32 %v944, %v992
    %v994 = vpop.f32.mrf.mxu0
    %v995 = vadd.f32 %v946, %v994
    %996 = vmatmul.bf16.gmra.mxu0 %v375
    %v997 = vpop.f32.mrf.mxu0
    %v998 = vadd.f32 %v949, %v997
    %v999 = vpop.f32.mrf.mxu0
    %v1000 = vadd.f32 %v951, %v999
    %1001 = vmatmul.bf16.gmra.mxu0 %v382
    %v1002 = vpop.f32.mrf.mxu0
    %v1003 = vadd.f32 %v954, %v1002
    %v1004 = vpop.f32.mrf.mxu0
    %v1005 = vadd.f32 %v956, %v1004
    %1006 = vmatmul.bf16.gmra.mxu0 %v389
    %v1007 = vpop.f32.mrf.mxu0
    %v1008 = vadd.f32 %v959, %v1007
    %v1009 = vpop.f32.mrf.mxu0
    %v1010 = vadd.f32 %v961, %v1009
    %1011 = vmatmul.bf16.gmra.mxu0 %v396
    %v1012 = vpop.f32.mrf.mxu0
    %v1013 = vadd.f32 %v964, %v1012
    %v1014 = vpop.f32.mrf.mxu0
    %v1015 = vadd.f32 %v966, %v1014
    %1016 = vmatmul.bf16.gmra.mxu0 %v403
    %v1017 = vpop.f32.mrf.mxu0
    %v1018 = vadd.f32 %v969, %v1017
    %v1019 = vpop.f32.mrf.mxu0
    %v1020 = vadd.f32 %v971, %v1019
    %1021 = vmatmul.bf16.gmra.mxu0 %v410
    %v1022 = vpop.f32.mrf.mxu0
    %v1023 = vadd.f32 %v974, %v1022
    %v1024 = vpop.f32.mrf.mxu0
    %v1025 = vadd.f32 %v976, %v1024
    %1026 = vmatmul.bf16.gmra.mxu0 %v417
    %v1027 = vpop.f32.mrf.mxu0
    %v1028 = vadd.f32 %v979, %v1027
    %v1029 = vpop.f32.mrf.mxu0
    %v1030 = vadd.f32 %v981, %v1029
    %1031 = vdwg.mxu0
    %1032 = vmatpush.bf16.msra.mxu0 %v711
    %1033 = vmatpush.bf16.msra.mxu0 %v710
    %1034 = vmatpush.bf16.msra.mxu0 %v709
    %1035 = vmatpush.bf16.msra.mxu0 %v708
    %1036 = vmatpush.bf16.msra.mxu0 %v707
    %1037 = vmatpush.bf16.msra.mxu0 %v706
    %1038 = vmatpush.bf16.msra.mxu0 %v705
    %1039 = vmatpush.bf16.msra.mxu0 %v704
    %1040 = vmatmul.bf16.gmra.mxu0 %v369
    %v1041 = vpop.f32.mrf.mxu0
    %v1042 = vadd.f32 %v993, %v1041
    %v1043 = vpop.f32.mrf.mxu0
    %v1044 = vadd.f32 %v995, %v1043
    %1045 = vmatmul.bf16.gmra.mxu0 %v376
    %v1046 = vpop.f32.mrf.mxu0
    %v1047 = vadd.f32 %v998, %v1046
    %v1048 = vpop.f32.mrf.mxu0
    %v1049 = vadd.f32 %v1000, %v1048
    %1050 = vmatmul.bf16.gmra.mxu0 %v383
    %v1051 = vpop.f32.mrf.mxu0
    %v1052 = vadd.f32 %v1003, %v1051
    %v1053 = vpop.f32.mrf.mxu0
    %v1054 = vadd.f32 %v1005, %v1053
    %1055 = vmatmul.bf16.gmra.mxu0 %v390
    %v1056 = vpop.f32.mrf.mxu0
    %v1057 = vadd.f32 %v1008, %v1056
    %v1058 = vpop.f32.mrf.mxu0
    %v1059 = vadd.f32 %v1010, %v1058
    %1060 = vmatmul.bf16.gmra.mxu0 %v397
    %v1061 = vpop.f32.mrf.mxu0
    %v1062 = vadd.f32 %v1013, %v1061
    %v1063 = vpop.f32.mrf.mxu0
    %v1064 = vadd.f32 %v1015, %v1063
    %1065 = vmatmul.bf16.gmra.mxu0 %v404
    %v1066 = vpop.f32.mrf.mxu0
    %v1067 = vadd.f32 %v1018, %v1066
    %v1068 = vpop.f32.mrf.mxu0
    %v1069 = vadd.f32 %v1020, %v1068
    %1070 = vmatmul.bf16.gmra.mxu0 %v411
    %v1071 = vpop.f32.mrf.mxu0
    %v1072 = vadd.f32 %v1023, %v1071
    %v1073 = vpop.f32.mrf.mxu0
    %v1074 = vadd.f32 %v1025, %v1073
    %1075 = vmatmul.bf16.gmra.mxu0 %v418
    %v1076 = vpop.f32.mrf.mxu0
    %v1077 = vadd.f32 %v1028, %v1076
    %v1078 = vpop.f32.mrf.mxu0
    %v1079 = vadd.f32 %v1030, %v1078
    %1080 = vdwg.mxu0
    %1081 = vmatpush.bf16.msra.mxu0 0
    %1082 = vmatpush.bf16.msra.mxu0 0
    %1083 = vmatpush.bf16.msra.mxu0 0
    %1084 = vmatpush.bf16.msra.mxu0 0
    %1085 = vmatpush.bf16.msra.mxu0 0
    %1086 = vmatpush.bf16.msra.mxu0 0
    %1087 = vmatpush.bf16.msra.mxu0 0
    %1088 = vmatpush.bf16.msra.mxu0 %v712
    %1089 = vmatmul.bf16.gmra.mxu0 %v764
    %v1090 = vpop.f32.mrf.mxu0
    %v1091 = vadd.f32 %v1042, %v1090
    %v1092 = vpop.f32.mrf.mxu0
    %v1093 = vadd.f32 %v1044, %v1092
    %1094 = vmatmul.bf16.gmra.mxu0 %v767
    %v1095 = vpop.f32.mrf.mxu0
    %v1096 = vadd.f32 %v1047, %v1095
    %v1097 = vpop.f32.mrf.mxu0
    %v1098 = vadd.f32 %v1049, %v1097
    %1099 = vmatmul.bf16.gmra.mxu0 %v770
    %v1100 = vpop.f32.mrf.mxu0
    %v1101 = vadd.f32 %v1052, %v1100
    %v1102 = vpop.f32.mrf.mxu0
    %v1103 = vadd.f32 %v1054, %v1102
    %1104 = vmatmul.bf16.gmra.mxu0 %v773
    %v1105 = vpop.f32.mrf.mxu0
    %v1106 = vadd.f32 %v1057, %v1105
    %v1107 = vpop.f32.mrf.mxu0
    %v1108 = vadd.f32 %v1059, %v1107
    %1109 = vmatmul.bf16.gmra.mxu0 %v776
    %v1110 = vpop.f32.mrf.mxu0
    %v1111 = vadd.f32 %v1062, %v1110
    %v1112 = vpop.f32.mrf.mxu0
    %v1113 = vadd.f32 %v1064, %v1112
    %1114 = vmatmul.bf16.gmra.mxu0 %v779
    %v1115 = vpop.f32.mrf.mxu0
    %v1116 = vadd.f32 %v1067, %v1115
    %v1117 = vpop.f32.mrf.mxu0
    %v1118 = vadd.f32 %v1069, %v1117
    %1119 = vmatmul.bf16.gmra.mxu0 %v782
    %v1120 = vpop.f32.mrf.mxu0
    %v1121 = vadd.f32 %v1072, %v1120
    %v1122 = vpop.f32.mrf.mxu0
    %v1123 = vadd.f32 %v1074, %v1122
    %1124 = vmatmul.bf16.gmra.mxu0 %v785
    %v1125 = vpop.f32.mrf.mxu0
    %v1126 = vadd.f32 %v1077, %v1125
    %v1127 = vpop.f32.mrf.mxu0
    %v1128 = vadd.f32 %v1079, %v1127
    %1129 = vdwg.mxu0
    %v1130 = vmax.f32 %v1091, 0.0
    %v1131 = vmax.f32 %v1093, 0.0
    %v1132 = vmax.f32 %v1096, 0.0
    %v1133 = vmax.f32 %v1098, 0.0
    %v1134 = vmax.f32 %v1101, 0.0
    %v1135 = vmax.f32 %v1103, 0.0
    %v1136 = vmax.f32 %v1106, 0.0
    %v1137 = vmax.f32 %v1108, 0.0
    %v1138 = vmax.f32 %v1111, 0.0
    %v1139 = vmax.f32 %v1113, 0.0
    %v1140 = vmax.f32 %v1116, 0.0
    %v1141 = vmax.f32 %v1118, 0.0
    %v1142 = vmax.f32 %v1121, 0.0
    %v1143 = vmax.f32 %v1123, 0.0
    %v1144 = vmax.f32 %v1126, 0.0
    %v1145 = vmax.f32 %v1128, 0.0
    %v1146 = vld [vmem:[%s3] sm:$0xff]
    %v1147 = vld [vmem:[%s3 + $0x8] sm:$0xff]
    %v1148 = vld [vmem:[%s3 + $0x10] sm:$0xff]
    %v1149 = vld [vmem:[%s3 + $0x18] sm:$0xff]
    %v1150 = vld [vmem:[%s4] sm:$0x1]
    %v1152 = vperm.slane %v1150, 0
    %vm1154 = vcmask 261120
    %v1156 = vsel %vm1154, %v1130, 0
    %v1159 = vsel %vm1154, %v1131, 0
    %v1162 = vsel %vm1154, %v1132, 0
    %v1165 = vsel %vm1154, %v1133, 0
    %v1168 = vsel %vm1154, %v1134, 0
    %v1171 = vsel %vm1154, %v1135, 0
    %v1174 = vsel %vm1154, %v1136, 0
    %v1177 = vsel %vm1154, %v1137, 0
    %v1180 = vsel %vm1154, %v1138, 0
    %v1183 = vsel %vm1154, %v1139, 0
    %v1186 = vsel %vm1154, %v1140, 0
    %v1189 = vsel %vm1154, %v1141, 0
    %v1192 = vsel %vm1154, %v1142, 0
    %v1195 = vsel %vm1154, %v1143, 0
    %v1198 = vsel %vm1154, %v1144, 0
    %v1201 = vsel %vm1154, %v1145, 0
    %1203 = vmatpush.msra.mxu0 0.0
    %1204 = vmatpush.msra.mxu0 0.0
    %1205 = vmatpush.msra.mxu0 0.0
    %1206 = vmatpush.msra.mxu0 0.0
    %1207 = vmatpush.msra.mxu0 0.0
    %1208 = vmatpush.msra.mxu0 0.0
    %1209 = vmatpush.msra.mxu0 0.0
    %1210 = vmatpush.msra.mxu0 0.0
    %1211 = vmatpush.msra.mxu0 0.0
    %1212 = vmatpush.msra.mxu0 0.0
    %1213 = vmatpush.msra.mxu0 0.0
    %1214 = vmatpush.msra.mxu0 0.0
    %1215 = vmatpush.msra.mxu0 %v1149
    %1216 = vmatpush.msra.mxu0 %v1148
    %1217 = vmatpush.msra.mxu0 %v1147
    %1218 = vmatpush.msra.mxu0 %v1146
    %1219 = vmatmul.f32.gmra.mxu0 %v1156
    %v1220 = vpop.f32.mrf.mxu0
    %v1221 = vadd.f32 %v1152, %v1220
    %1222 = vmatmul.f32.gmra.mxu0 %v1159
    %v1223 = vpop.f32.mrf.mxu0
    %v1224 = vadd.f32 %v1152, %v1223
    %1225 = vmatmul.f32.gmra.mxu0 %v1162
    %v1226 = vpop.f32.mrf.mxu0
    %v1227 = vadd.f32 %v1152, %v1226
    %1228 = vmatmul.f32.gmra.mxu0 %v1165
    %v1229 = vpop.f32.mrf.mxu0
    %v1230 = vadd.f32 %v1152, %v1229
    %1231 = vmatmul.f32.gmra.mxu0 %v1168
    %v1232 = vpop.f32.mrf.mxu0
    %v1233 = vadd.f32 %v1152, %v1232
    %1234 = vmatmul.f32.gmra.mxu0 %v1171
    %v1235 = vpop.f32.mrf.mxu0
    %v1236 = vadd.f32 %v1152, %v1235
    %1237 = vmatmul.f32.gmra.mxu0 %v1174
    %v1238 = vpop.f32.mrf.mxu0
    %v1239 = vadd.f32 %v1152, %v1238
    %1240 = vmatmul.f32.gmra.mxu0 %v1177
    %v1241 = vpop.f32.mrf.mxu0
    %v1242 = vadd.f32 %v1152, %v1241
    %1243 = vmatmul.f32.gmra.mxu0 %v1180
    %v1244 = vpop.f32.mrf.mxu0
    %v1245 = vadd.f32 %v1152, %v1244
    %1246 = vmatmul.f32.gmra.mxu0 %v1183
    %v1247 = vpop.f32.mrf.mxu0
    %v1248 = vadd.f32 %v1152, %v1247
    %1249 = vmatmul.f32.gmra.mxu0 %v1186
    %v1250 = vpop.f32.mrf.mxu0
    %v1251 = vadd.f32 %v1152, %v1250
    %1252 = vmatmul.f32.gmra.mxu0 %v1189
    %v1253 = vpop.f32.mrf.mxu0
    %v1254 = vadd.f32 %v1152, %v1253
    %1255 = vmatmul.f32.gmra.mxu0 %v1192
    %v1256 = vpop.f32.mrf.mxu0
    %v1257 = vadd.f32 %v1152, %v1256
    %1258 = vmatmul.f32.gmra.mxu0 %v1195
    %v1259 = vpop.f32.mrf.mxu0
    %v1260 = vadd.f32 %v1152, %v1259
    %1261 = vmatmul.f32.gmra.mxu0 %v1198
    %v1262 = vpop.f32.mrf.mxu0
    %v1263 = vadd.f32 %v1152, %v1262
    %1264 = vmatmul.f32.gmra.mxu0 %v1201
    %v1265 = vpop.f32.mrf.mxu0
    %v1266 = vadd.f32 %v1152, %v1265
    %1267 = vdwg.mxu0
    %v1268 = vmax.f32 %v1221, 0.0
    %v1269 = vmax.f32 %v1224, 0.0
    %v1270 = vmax.f32 %v1227, 0.0
    %v1271 = vmax.f32 %v1230, 0.0
    %v1272 = vmax.f32 %v1233, 0.0
    %v1273 = vmax.f32 %v1236, 0.0
    %v1274 = vmax.f32 %v1239, 0.0
    %v1275 = vmax.f32 %v1242, 0.0
    %v1276 = vmax.f32 %v1245, 0.0
    %v1277 = vmax.f32 %v1248, 0.0
    %v1278 = vmax.f32 %v1251, 0.0
    %v1279 = vmax.f32 %v1254, 0.0
    %v1280 = vmax.f32 %v1257, 0.0
    %v1281 = vmax.f32 %v1260, 0.0
    %v1282 = vmax.f32 %v1263, 0.0
    %v1283 = vmax.f32 %v1266, 0.0
    %1284 = vst [vmem:[#allocation2] sm:$0xff] %v1268
    %1285 = vst [vmem:[#allocation2 + $0x8] sm:$0xff] %v1269
    %1286 = vst [vmem:[#allocation2 + $0x10] sm:$0xff] %v1270
    %1287 = vst [vmem:[#allocation2 + $0x18] sm:$0xff] %v1271
    %1288 = vst [vmem:[#allocation2 + $0x20] sm:$0xff] %v1272
    %1289 = vst [vmem:[#allocation2 + $0x28] sm:$0xff] %v1273
    %1290 = vst [vmem:[#allocation2 + $0x30] sm:$0xff] %v1274
    %1291 = vst [vmem:[#allocation2 + $0x38] sm:$0xff] %v1275
    %1292 = vst [vmem:[#allocation2 + $0x40] sm:$0xff] %v1276
    %1293 = vst [vmem:[#allocation2 + $0x48] sm:$0xff] %v1277
    %1294 = vst [vmem:[#allocation2 + $0x50] sm:$0xff] %v1278
    %1295 = vst [vmem:[#allocation2 + $0x58] sm:$0xff] %v1279
    %1296 = vst [vmem:[#allocation2 + $0x60] sm:$0xff] %v1280
    %1297 = vst [vmem:[#allocation2 + $0x68] sm:$0xff] %v1281
    %1298 = vst [vmem:[#allocation2 + $0x70] sm:$0xff] %v1282
    %1299 = vst [vmem:[#allocation2 + $0x78] sm:$0xff] %v1283
    // Predicated region
    $region22: #{tpu_custom_call.1} parent=1 // pred_check
      _
    $region23: #{tpu_custom_call.1} parent=1 // pred_check_branch
      %1301 = sbr.rel (0) target = $region25
    $region24: #{tpu_custom_call.1} parent=1 // pred_region
      %1303 = vsyncadd [#allocation3], 0
      %s1304 = sshll.u32 [#allocation2], 4
      %s1305 = int_to_ptr.vmem [resolvable:$true] %s1304
      %s1306 = sshll.u32 %s5, 4
      %s1307 = int_to_ptr.hbm [resolvable:$true] %s1306
      %1312 = dma.vmem_to_hbm [thread:$0]  %s1305, 2048, %s1307, [#allocation3], 128, 128, 8
    $region25: #{tpu_custom_call.1} parent=1 // pred_fallthru
      _
    // Predicated region
    $region26: #{tpu_custom_call.1} parent=1 // pred_check
      _
    $region27: #{tpu_custom_call.1} parent=1 // pred_check_branch
      %1314 = sbr.rel (0) target = $region29
    $region28: #{tpu_custom_call.1} parent=1 // pred_region
      %1316 = dma.done [#allocation3], 2048
    $region29: #{tpu_custom_call.1} parent=1 // pred_fallthru
      _
    %1317 = vsyncpa [#allocation3], 1

</llo_original>
